<compile_context>
chip_gen: v5e
topology: v5e:2x2
jax: 0.10.0
libtpu: 0.0.40
codegen_flags: <defaults>
</compile_context>

<pallas_src>
import jax
import jax.numpy as jnp
from jax.experimental import pallas as pl
from jax.experimental.pallas import tpu as pltpu


# ---------------------------------------------------------------------------
# Fused kernel: matmul -> BN(batch stats) -> affine -> LeakyReLU(0.2)
# computed in transposed (lane-dense) layout: out[cout, m]
# ---------------------------------------------------------------------------
def _make_downblock_kernel(*, tm: int, m_true: int, eps: float, neg_slope: float):
    inv_m = 1.0 / float(m_true)

    def kernel(pT_ref, wT_ref, g_ref, b_ref, oT_ref,
               raw_ref, sum_ref, ssq_ref, scale_ref, shift_ref):
        p = pl.program_id(0)   # 0: conv + stats accumulation, 1: BN + LeakyReLU
        i = pl.program_id(1)   # M-tile index
        col = pl.multiple_of(i * tm, 128)

        @pl.when(jnp.logical_and(p == 0, i == 0))
        def _init():
            sum_ref[...] = jnp.zeros_like(sum_ref)
            ssq_ref[...] = jnp.zeros_like(ssq_ref)

        @pl.when(p == 0)
        def _conv_and_stats():
            # (Np, K) bf16 @ (K, tm) bf16 -> (Np, tm) f32 on the MXU.
            y = jnp.dot(wT_ref[...], pT_ref[...],
                        preferred_element_type=jnp.float32)
            # Park raw pre-BN activations in the VMEM-resident scratch slab
            # (tm multiple of 128 -> aligned, unmasked lane-dense store).
            raw_ref[:, pl.ds(col, tm)] = y
            # Single-pass BN statistics (zero-padded M columns contribute 0).
            sum_ref[...] += jnp.sum(y, axis=1, keepdims=True)
            ssq_ref[...] += jnp.sum(y * y, axis=1, keepdims=True)

        @pl.when(jnp.logical_and(p == 1, i == 0))
        def _finalize_stats():
            mean = sum_ref[...] * inv_m                                   # (Np, 1)
            var = jnp.maximum(ssq_ref[...] * inv_m - mean * mean, 0.0)    # E[y^2]-mean^2
            scale_ref[...] = g_ref[...] * jax.lax.rsqrt(var + eps)
            shift_ref[...] = b_ref[...] - mean * scale_ref[...]

        @pl.when(p == 1)
        def _bn_lrelu():
            z = raw_ref[:, pl.ds(col, tm)] * scale_ref[...] + shift_ref[...]
            oT_ref[...] = jnp.where(z >= 0.0, z, neg_slope * z)           # LeakyReLU(0.2)

    return kernel


# ---------------------------------------------------------------------------
# Wrapper: transposed im2col (glue) + fused Pallas kernel
# ---------------------------------------------------------------------------
def down_block_forward(params, x, *, tm: int = 512):
    """x: (B, Cin, H, W) NCHW (PyTorch convention) -> (B, Cout, H//2, W//2)."""
    w, gamma, beta = params["w"], params["gamma"], params["beta"]
    cout, cin, k, _ = w.shape
    B, _, H, W = x.shape
    stride, pad = 2, 1
    Ho = (H + 2 * pad - k) // stride + 1
    Wo = (W + 2 * pad - k) // stride + 1
    M = B * Ho * Wo
    K = k * k * cin

    # NCHW -> NHWC, spatial zero pad.
    xh = jnp.transpose(x, (0, 2, 3, 1))
    xp = jnp.pad(xh, ((0, 0), (pad, pad), (pad, pad), (0, 0)))

    # Transposed im2col: pT (K, M); K ordered (kh, kw, cin), M ordered (b, ho, wo).
    cols = []
    for i in range(k):
        for j in range(k):
            tap = xp[:, i:i + stride * (Ho - 1) + 1:stride,
                      j:j + stride * (Wo - 1) + 1:stride, :]      # (B, Ho, Wo, Cin)
            cols.append(jnp.transpose(tap, (3, 0, 1, 2)).reshape(cin, M))
    pT = jnp.concatenate(cols, axis=0)                            # (K, M)

    # Tiling / padding: lanes (M) to a multiple of the 128-aligned tile,
    # sublanes (Cout) to a multiple of 8.
    tm = max(128, (min(tm, 1024) // 128) * 128)
    M_pad = pl.cdiv(M, tm) * tm
    Np = pl.cdiv(cout, 8) * 8
    n_tiles = M_pad // tm
    last = n_tiles - 1

    pT = jnp.pad(pT, ((0, 0), (0, M_pad - M))).astype(jnp.bfloat16)
    wT = jnp.transpose(w, (0, 2, 3, 1)).reshape(cout, K)          # (Cout, K), (kh,kw,cin)
    wT = jnp.pad(wT, ((0, Np - cout), (0, 0))).astype(jnp.bfloat16)
    g2 = jnp.pad(gamma.reshape(cout, 1), ((0, Np - cout), (0, 0))).astype(jnp.float32)
    b2 = jnp.pad(beta.reshape(cout, 1), ((0, Np - cout), (0, 0))).astype(jnp.float32)

    kernel = _make_downblock_kernel(tm=tm, m_true=M, eps=1e-5, neg_slope=0.2)

    outT = pl.pallas_call(
        kernel,
        out_shape=jax.ShapeDtypeStruct((Np, M_pad), jnp.float32),
        grid_spec=pltpu.PrefetchScalarGridSpec(
            num_scalar_prefetch=0,
            grid=(2, n_tiles),                      # (phase, M tile); row-major order
            in_specs=[
                # Phase 0 streams M tiles; phase 1 pins the last fetched block
                # so no redundant patch DMA is issued during the epilogue.
                pl.BlockSpec((K, tm), lambda p, i: (0, i * (1 - p) + last * p)),
                pl.BlockSpec((Np, K), lambda p, i: (0, 0)),    # weights (resident)
                pl.BlockSpec((Np, 1), lambda p, i: (0, 0)),    # gamma
                pl.BlockSpec((Np, 1), lambda p, i: (0, 0)),    # beta
            ],
            # Output blocks are produced only in phase 1; during phase 0 the
            # index stays pinned at block 0 so nothing is written back early.
            # In phase 1 the per-tile blocks pipeline the HBM writeback.
            out_specs=pl.BlockSpec((Np, tm), lambda p, i: (0, i * p)),
            scratch_shapes=[
                pltpu.VMEM((Np, M_pad), jnp.float32),   # raw conv activations
                pltpu.VMEM((Np, 1), jnp.float32),       # running sum
                pltpu.VMEM((Np, 1), jnp.float32),       # running sum of squares
                pltpu.VMEM((Np, 1), jnp.float32),       # BN scale
                pltpu.VMEM((Np, 1), jnp.float32),       # BN shift
            ],
        ),
        compiler_params=pltpu.CompilerParams(
            # Cross-iteration BN-stats carry + resident scratch slab:
            # both axes are reduction-style, not "parallel".
            dimension_semantics=("arbitrary", "arbitrary"),
            # Safe on v5e/v6e/v7x; the resident (Np, M_pad) f32 slab is the
            # scaling concern at production sizes.
            vmem_limit_bytes=32 * 1024 * 1024,
        ),
    )(pT, wT, g2, b2)

    # (Cout, M) -> (B, Cout, Ho, Wo) NCHW
    out = outT[:cout, :M].reshape(cout, B, Ho, Wo)
    return jnp.transpose(out, (1, 0, 2, 3))


# ---------------------------------------------------------------------------
# Parameters (deterministic, synthetic — shapes match the PyTorch module)
# ---------------------------------------------------------------------------
def init_params(key, in_channels, out_channels, k=4):
    k1, k2, k3 = jax.random.split(key, 3)
    fan_in = in_channels * k * k
    w = jax.random.normal(k1, (out_channels, in_channels, k, k), jnp.float32) \
        * (2.0 / fan_in) ** 0.5
    gamma = 1.0 + 0.1 * jax.random.normal(k2, (out_channels,), jnp.float32)
    beta = 0.1 * jax.random.normal(k3, (out_channels,), jnp.float32)
    return {"w": w, "gamma": gamma, "beta": beta}


# Pure-JAX reference (f32) for a correctness sanity check.
def down_block_reference(params, x):
    w, gamma, beta = params["w"], params["gamma"], params["beta"]
    y = jax.lax.conv_general_dilated(
        x, w, window_strides=(2, 2), padding=((1, 1), (1, 1)),
        dimension_numbers=("NCHW", "OIHW", "NCHW"))
    mean = jnp.mean(y, axis=(0, 2, 3), keepdims=True)
    var = jnp.mean(jnp.square(y - mean), axis=(0, 2, 3), keepdims=True)
    yn = (y - mean) * jax.lax.rsqrt(var + 1e-5)
    yn = yn * gamma.reshape(1, -1, 1, 1) + beta.reshape(1, -1, 1, 1)
    return jnp.where(yn >= 0.0, yn, 0.2 * yn)


if __name__ == "__main__":
    batch, cin, cout, spatial = 2, 4, 8, 32   # M = 2*16*16 = 512 -> 4 tiles of 128
    key = jax.random.PRNGKey(0)
    kp, kx = jax.random.split(key)

    params = init_params(kp, cin, cout)
    x = jax.random.normal(kx, (batch, cin, spatial, spatial), jnp.float32)

    fwd = jax.jit(lambda p, xx: down_block_forward(p, xx, tm=128))
    out = fwd(params, x)
    jax.block_until_ready(out)

    assert out.shape == (batch, cout, spatial // 2, spatial // 2)
    ref = down_block_reference(params, x)
    err = float(jnp.max(jnp.abs(out - ref)))
    # bf16 MXU operands with f32 accumulation/stats: small, bounded error.
    assert err < 5e-2, f"max abs err vs reference: {err}"
    print("KERNEL_OK")
</pallas_src>

<mosaic_0001>
module attributes {stable_mosaic.version = 11 : i64} {
  func.func @kernel(%arg0: i32, %arg1: i32, %arg2: memref<64x128xbf16, #tpu.memory_space<vmem>>, %arg3: memref<8x64xbf16, #tpu.memory_space<vmem>>, %arg4: memref<8x1xf32, #tpu.memory_space<vmem>>, %arg5: memref<8x1xf32, #tpu.memory_space<vmem>>, %arg6: memref<8x128xf32, #tpu.memory_space<vmem>>, %arg7: memref<8x512xf32, #tpu.memory_space<vmem>>, %arg8: memref<8x1xf32, #tpu.memory_space<vmem>>, %arg9: memref<8x1xf32, #tpu.memory_space<vmem>>, %arg10: memref<8x1xf32, #tpu.memory_space<vmem>>, %arg11: memref<8x1xf32, #tpu.memory_space<vmem>>) attributes {dimension_semantics = [#tpu.dimension_semantics<arbitrary>, #tpu.dimension_semantics<arbitrary>], iteration_bounds = array<i64: 2, 4>, scalar_prefetch = 0 : i64, scratch_operands = 5 : i64, tpu.core_type = #tpu.core_type<tc>, window_params = [{transform_indices = @transform_0, window_bounds = array<i64: 64, 128>}, {pipeline_mode = #tpu.pipeline_mode<synchronous>, transform_indices = @transform_1, window_bounds = array<i64: 8, 64>}, {pipeline_mode = #tpu.pipeline_mode<synchronous>, transform_indices = @transform_2, window_bounds = array<i64: 8, 1>}, {pipeline_mode = #tpu.pipeline_mode<synchronous>, transform_indices = @transform_3, window_bounds = array<i64: 8, 1>}, {transform_indices = @transform_4, window_bounds = array<i64: 8, 128>}]} {
    %c128_i32 = arith.constant 128 : i32
    %0 = arith.muli %arg1, %c128_i32 : i32
    %1 = tpu.assume_multiple %0, 128 : i32
    %c0_i32 = arith.constant 0 : i32
    %2 = arith.cmpi eq, %arg0, %c0_i32 : i32
    %c0_i32_0 = arith.constant 0 : i32
    %3 = arith.cmpi eq, %arg1, %c0_i32_0 : i32
    %4 = arith.andi %2, %3 : i1
    %5 = arith.extui %4 : i1 to i32
    %c0_i32_1 = arith.constant 0 : i32
    %6 = arith.cmpi ne, %5, %c0_i32_1 : i32
    scf.if %6 {
      %cst = arith.constant 0.000000e+00 : f32
      %18 = vector.broadcast %cst : f32 to vector<8x1xf32>
      %c0 = arith.constant 0 : index
      %c0_8 = arith.constant 0 : index
      %19 = vector.load %arg8[%c0, %c0_8] : memref<8x1xf32, #tpu.memory_space<vmem>>, vector<8x1xf32>
      tpu.vector_store %arg8[%c0, %c0_8], %18 {strides = array<i32>} : memref<8x1xf32, #tpu.memory_space<vmem>>, vector<8x1xf32>,
      %cst_9 = arith.constant 0.000000e+00 : f32
      %20 = vector.broadcast %cst_9 : f32 to vector<8x1xf32>
      %c0_10 = arith.constant 0 : index
      %c0_11 = arith.constant 0 : index
      %21 = vector.load %arg9[%c0_10, %c0_11] : memref<8x1xf32, #tpu.memory_space<vmem>>, vector<8x1xf32>
      tpu.vector_store %arg9[%c0_10, %c0_11], %20 {strides = array<i32>} : memref<8x1xf32, #tpu.memory_space<vmem>>, vector<8x1xf32>,
    } else {
    }
    %c0_i32_2 = arith.constant 0 : i32
    %7 = arith.cmpi eq, %arg0, %c0_i32_2 : i32
    %8 = arith.extui %7 : i1 to i32
    %c0_i32_3 = arith.constant 0 : i32
    %9 = arith.cmpi ne, %8, %c0_i32_3 : i32
    scf.if %9 {
      %c0 = arith.constant 0 : index
      %c0_8 = arith.constant 0 : index
      %18 = vector.load %arg3[%c0, %c0_8] : memref<8x64xbf16, #tpu.memory_space<vmem>>, vector<8x64xbf16>
      %c0_9 = arith.constant 0 : index
      %c0_10 = arith.constant 0 : index
      %19 = vector.load %arg2[%c0_9, %c0_10] : memref<64x128xbf16, #tpu.memory_space<vmem>>, vector<64x128xbf16>
      %cst = arith.constant dense<0.000000e+00> : vector<8x128xf32>
      %20 = tpu.matmul %18, %19, %cst {dimension_numbers = #tpu.dot_dimension_numbers<[1], [0], [0], [1], [0, 0, 1, 1], [], []>} : vector<8x64xbf16>, vector<64x128xbf16>, vector<8x128xf32> -> vector<8x128xf32>
      %c0_11 = arith.constant 0 : index
      %21 = arith.index_cast %1 : i32 to index
      %22 = vector.load %arg7[%c0_11, %21] : memref<8x512xf32, #tpu.memory_space<vmem>>, vector<8x128xf32>
      tpu.vector_store %arg7[%c0_11, %21], %20 {strides = array<i32>} : memref<8x512xf32, #tpu.memory_space<vmem>>, vector<8x128xf32>,
      %c0_12 = arith.constant 0 : index
      %c0_13 = arith.constant 0 : index
      %23 = vector.load %arg8[%c0_12, %c0_13] : memref<8x1xf32, #tpu.memory_space<vmem>>, vector<8x1xf32>
      %cst_14 = arith.constant dense<0.000000e+00> : vector<8xf32>
      %24 = vector.multi_reduction <add>, %20, %cst_14 [1] : vector<8x128xf32> to vector<8xf32>
      %25 = vector.shape_cast %24 : vector<8xf32> to vector<8x1xf32>
      %26 = arith.addf %23, %25 : vector<8x1xf32>
      %c0_15 = arith.constant 0 : index
      %c0_16 = arith.constant 0 : index
      %27 = vector.load %arg8[%c0_15, %c0_16] : memref<8x1xf32, #tpu.memory_space<vmem>>, vector<8x1xf32>
      tpu.vector_store %arg8[%c0_15, %c0_16], %26 {strides = array<i32>} : memref<8x1xf32, #tpu.memory_space<vmem>>, vector<8x1xf32>,
      %c0_17 = arith.constant 0 : index
      %c0_18 = arith.constant 0 : index
      %28 = vector.load %arg9[%c0_17, %c0_18] : memref<8x1xf32, #tpu.memory_space<vmem>>, vector<8x1xf32>
      %29 = arith.mulf %20, %20 : vector<8x128xf32>
      %cst_19 = arith.constant dense<0.000000e+00> : vector<8xf32>
      %30 = vector.multi_reduction <add>, %29, %cst_19 [1] : vector<8x128xf32> to vector<8xf32>
      %31 = vector.shape_cast %30 : vector<8xf32> to vector<8x1xf32>
      %32 = arith.addf %28, %31 : vector<8x1xf32>
      %c0_20 = arith.constant 0 : index
      %c0_21 = arith.constant 0 : index
      %33 = vector.load %arg9[%c0_20, %c0_21] : memref<8x1xf32, #tpu.memory_space<vmem>>, vector<8x1xf32>
      tpu.vector_store %arg9[%c0_20, %c0_21], %32 {strides = array<i32>} : memref<8x1xf32, #tpu.memory_space<vmem>>, vector<8x1xf32>,
    } else {
    }
    %c1_i32 = arith.constant 1 : i32
    %10 = arith.cmpi eq, %arg0, %c1_i32 : i32
    %c0_i32_4 = arith.constant 0 : i32
    %11 = arith.cmpi eq, %arg1, %c0_i32_4 : i32
    %12 = arith.andi %10, %11 : i1
    %13 = arith.extui %12 : i1 to i32
    %c0_i32_5 = arith.constant 0 : i32
    %14 = arith.cmpi ne, %13, %c0_i32_5 : i32
    scf.if %14 {
      %c0 = arith.constant 0 : index
      %c0_8 = arith.constant 0 : index
      %18 = vector.load %arg8[%c0, %c0_8] : memref<8x1xf32, #tpu.memory_space<vmem>>, vector<8x1xf32>
      %cst = arith.constant 0.001953125 : f32
      %19 = vector.broadcast %cst : f32 to vector<8x1xf32>
      %20 = arith.mulf %18, %19 : vector<8x1xf32>
      %c0_9 = arith.constant 0 : index
      %c0_10 = arith.constant 0 : index
      %21 = vector.load %arg9[%c0_9, %c0_10] : memref<8x1xf32, #tpu.memory_space<vmem>>, vector<8x1xf32>
      %cst_11 = arith.constant 0.001953125 : f32
      %22 = vector.broadcast %cst_11 : f32 to vector<8x1xf32>
      %23 = arith.mulf %21, %22 : vector<8x1xf32>
      %24 = arith.mulf %20, %20 : vector<8x1xf32>
      %25 = arith.subf %23, %24 : vector<8x1xf32>
      %cst_12 = arith.constant 0.000000e+00 : f32
      %26 = vector.broadcast %cst_12 : f32 to vector<8x1xf32>
      %27 = arith.maximumf %25, %26 : vector<8x1xf32>
      %c0_13 = arith.constant 0 : index
      %c0_14 = arith.constant 0 : index
      %28 = vector.load %arg4[%c0_13, %c0_14] : memref<8x1xf32, #tpu.memory_space<vmem>>, vector<8x1xf32>
      %cst_15 = arith.constant 9.99999974E-6 : f32
      %29 = vector.broadcast %cst_15 : f32 to vector<8x1xf32>
      %30 = arith.addf %27, %29 : vector<8x1xf32>
      %31 = math.rsqrt %30 : vector<8x1xf32>
      %32 = arith.mulf %28, %31 : vector<8x1xf32>
      %c0_16 = arith.constant 0 : index
      %c0_17 = arith.constant 0 : index
      %33 = vector.load %arg10[%c0_16, %c0_17] : memref<8x1xf32, #tpu.memory_space<vmem>>, vector<8x1xf32>
      tpu.vector_store %arg10[%c0_16, %c0_17], %32 {strides = array<i32>} : memref<8x1xf32, #tpu.memory_space<vmem>>, vector<8x1xf32>,
      %c0_18 = arith.constant 0 : index
      %c0_19 = arith.constant 0 : index
      %34 = vector.load %arg5[%c0_18, %c0_19] : memref<8x1xf32, #tpu.memory_space<vmem>>, vector<8x1xf32>
      %c0_20 = arith.constant 0 : index
      %c0_21 = arith.constant 0 : index
      %35 = vector.load %arg10[%c0_20, %c0_21] : memref<8x1xf32, #tpu.memory_space<vmem>>, vector<8x1xf32>
      %36 = arith.mulf %20, %35 : vector<8x1xf32>
      %37 = arith.subf %34, %36 : vector<8x1xf32>
      %c0_22 = arith.constant 0 : index
      %c0_23 = arith.constant 0 : index
      %38 = vector.load %arg11[%c0_22, %c0_23] : memref<8x1xf32, #tpu.memory_space<vmem>>, vector<8x1xf32>
      tpu.vector_store %arg11[%c0_22, %c0_23], %37 {strides = array<i32>} : memref<8x1xf32, #tpu.memory_space<vmem>>, vector<8x1xf32>,
    } else {
    }
    %c1_i32_6 = arith.constant 1 : i32
    %15 = arith.cmpi eq, %arg0, %c1_i32_6 : i32
    %16 = arith.extui %15 : i1 to i32
    %c0_i32_7 = arith.constant 0 : i32
    %17 = arith.cmpi ne, %16, %c0_i32_7 : i32
    scf.if %17 {
      %c0 = arith.constant 0 : index
      %18 = arith.index_cast %1 : i32 to index
      %19 = vector.load %arg7[%c0, %18] : memref<8x512xf32, #tpu.memory_space<vmem>>, vector<8x128xf32>
      %c0_8 = arith.constant 0 : index
      %c0_9 = arith.constant 0 : index
      %20 = vector.load %arg10[%c0_8, %c0_9] : memref<8x1xf32, #tpu.memory_space<vmem>>, vector<8x1xf32>
      %21 = vector.broadcast %20 : vector<8x1xf32> to vector<8x128xf32>
      %22 = arith.mulf %19, %21 : vector<8x128xf32>
      %c0_10 = arith.constant 0 : index
      %c0_11 = arith.constant 0 : index
      %23 = vector.load %arg11[%c0_10, %c0_11] : memref<8x1xf32, #tpu.memory_space<vmem>>, vector<8x1xf32>
      %24 = vector.broadcast %23 : vector<8x1xf32> to vector<8x128xf32>
      %25 = arith.addf %22, %24 : vector<8x128xf32>
      %cst = arith.constant 0.000000e+00 : f32
      %26 = vector.broadcast %cst : f32 to vector<8x128xf32>
      %27 = arith.cmpf oge, %25, %26 : vector<8x128xf32>
      %cst_12 = arith.constant 2.000000e-01 : f32
      %28 = vector.broadcast %cst_12 : f32 to vector<8x128xf32>
      %29 = arith.mulf %28, %25 : vector<8x128xf32>
      %30 = arith.select %27, %25, %29 : vector<8x128xi1>, vector<8x128xf32>
      %c0_13 = arith.constant 0 : index
      %c0_14 = arith.constant 0 : index
      %31 = vector.load %arg6[%c0_13, %c0_14] : memref<8x128xf32, #tpu.memory_space<vmem>>, vector<8x128xf32>
      tpu.vector_store %arg6[%c0_13, %c0_14], %30 {strides = array<i32>} : memref<8x128xf32, #tpu.memory_space<vmem>>, vector<8x128xf32>,
    } else {
    }
    return
  }
  func.func @transform_0(%arg0: i32, %arg1: i32) -> (i32, i32) {
    %c1_i32 = arith.constant 1 : i32
    %0 = arith.subi %c1_i32, %arg0 : i32
    %1 = arith.muli %arg1, %0 : i32
    %c3_i32 = arith.constant 3 : i32
    %2 = arith.muli %c3_i32, %arg0 : i32
    %3 = arith.addi %1, %2 : i32
    %c0_i32 = arith.constant 0 : i32
    %c0_i32_0 = arith.constant 0 : i32
    return %c0_i32, %3 : i32, i32
  }
  func.func @transform_1(%arg0: i32, %arg1: i32) -> (i32, i32) {
    %c0_i32 = arith.constant 0 : i32
    %c0_i32_0 = arith.constant 0 : i32
    %c0_i32_1 = arith.constant 0 : i32
    return %c0_i32, %c0_i32_0 : i32, i32
  }
  func.func @transform_2(%arg0: i32, %arg1: i32) -> (i32, i32) {
    %c0_i32 = arith.constant 0 : i32
    %c0_i32_0 = arith.constant 0 : i32
    %c0_i32_1 = arith.constant 0 : i32
    return %c0_i32, %c0_i32_0 : i32, i32
  }
  func.func @transform_3(%arg0: i32, %arg1: i32) -> (i32, i32) {
    %c0_i32 = arith.constant 0 : i32
    %c0_i32_0 = arith.constant 0 : i32
    %c0_i32_1 = arith.constant 0 : i32
    return %c0_i32, %c0_i32_0 : i32, i32
  }
  func.func @transform_4(%arg0: i32, %arg1: i32) -> (i32, i32) {
    %0 = arith.muli %arg1, %arg0 : i32
    %c0_i32 = arith.constant 0 : i32
    %c0_i32_0 = arith.constant 0 : i32
    return %c0_i32, %0 : i32, i32
  }
}

</mosaic_0001>

<llo_original>
// kernel: _lambda_.1
$region0: #{_lambda_.1}
  #allocation0 [shape = 'u32[]', space=smem, size = 0x4, offset = 0x4, fixed_abs, tag = 'smem constant byte address 0x4 - core index']
  #allocation1 [shape = 'u32[72,128]{1,0:T(1,128)}', space=vmem, size = 0x9000, scoped, tag = 'internal scratch']
  #allocation2 [shape = 'f32[8,512]{1,0:T(8,128)}', space=vmem, size = 0x4000, scoped, tag = 'scratch operand']
  #allocation3 [shape = 'f32[8,1]{1,0:T(8,128)}', space=vmem, size = 0x1000, scoped, tag = 'scratch operand']
  #allocation4 [shape = 'f32[8,1]{1,0:T(8,128)}', space=vmem, size = 0x1000, scoped, tag = 'scratch operand']
  #allocation5 [shape = 'f32[8,1]{1,0:T(8,128)}', space=vmem, size = 0x1000, scoped, tag = 'scratch operand']
  #allocation6 [shape = 'f32[8,1]{1,0:T(8,128)}', space=vmem, size = 0x1000, scoped, tag = 'scratch operand']
  %s0 = inlined_call_operand.vmem [shape: bf16[64,512], index: 0, kind: input, shape index: {}]
  %s1 = inlined_call_operand.vmem [shape: bf16[8,64], index: 1, kind: input, shape index: {}]
  %s2 = inlined_call_operand.vmem [shape: f32[8,1], index: 2, kind: input, shape index: {}]
  %s3 = inlined_call_operand.vmem [shape: f32[8,1], index: 3, kind: input, shape index: {}]
  %s4 = inlined_call_operand.vmem [shape: f32[8,512], index: 4, kind: output, shape index: {}]
  %s5 = sld [smem:[#allocation0]]
  $region106: #{_lambda_.1} parent=0
    _
  %s7 = ssub.s32 1, %s5
  %s8 = scalar_select 0, %s7, %s5
  $region1: #{_lambda_.1} parent=0
    #allocation7 [shape = 'u8[32768]{0}', space=vmem, size = 0x8000, scoped, tag = 'input window, operand 0']
    loop: start=0, step=1, limit=10
    $region2: #{_lambda_.1} parent=1 // loop_pre_header
      _
    $region3: #{_lambda_.1} parent=1 // loop_header
      %s10 = sphi 0, %s14
      %p11 = scmp.ge.s32.totalorder %s10, 10
      %s17 = sphi 0, %s29
      %s18 = sphi 0, %s25
      %s19 = sphi 0, %s17
      %s20 = sphi 0, %s18
      %s21 = sphi 0, %s19
      %s22 = sphi 0, %s20
      %s40 = sphi 0, %s42
      %s43 = sphi 0, %s40
      %s44 = sphi 0, %s43
      %s60 = sphi 0, %s44
      %s64 = sphi 0, %s64
      %s66 = sphi 0, %s64
      %s67 = sphi 0, %s66
      %s81 = sphi 0, %s67
      %s85 = sphi 0, %s85
      %s87 = sphi 0, %s85
      %s88 = sphi 0, %s87
      %s102 = sphi 0, %s88
      %s106 = sphi 0, %s106
      %s108 = sphi 0, %s106
      %s109 = sphi 0, %s108
      %s123 = sphi 0, %s109
      %s131 = sphi 0, %s133
      %s134 = sphi 0, %s131
      %s135 = sphi 0, %s134
      %s151 = sphi 0, %s135
    $region4: #{_lambda_.1} parent=1 // loop_header_branch
      %13 = sbr.rel (%p11) target = $region8
    $region5: #{_lambda_.1} parent=1 // loop_body
      %s15 = ssub.s32 %s10, 1
      %s16 = ssub.s32 %s10, 2
      %s23 = sadd.s32 1, %s18
      %p24 = scmp.ge.s32.totalorder %s23, 4
      %s25 = scalar_select %p24, 0, %s23
      %s26 = sadd.s32 1, %s17
      %s27 = scalar_select %p24, %s26, %s17
      %p28 = scmp.ge.s32.totalorder %s27, 2
      %s29 = scalar_select %p28, 0, %s27
      %s30 = ssub.s32 1, %s17
      %s31 = smul.u32 %s18, %s30
      %s32 = smul.u32 %s17, 3
      %s33 = sadd.s32 %s31, %s32
      %s34 = ssub.s32 1, %s29
      %s35 = smul.u32 %s25, %s34
      %s36 = smul.u32 %s29, 3
      %s37 = sadd.s32 %s35, %s36
      %s38 = ssub.s32 %s33, %s37
      %p39 = scmp.eq.s32.totalorder %s38, 0
      %s41 = sadd.s32 %s40, 1
      %s42 = scalar_select %p39, %s40, %s41
      %p45 = pneg %p39
      %p46 = scmp.eq.s32.totalorder %s10, 7
      %p47 = por %p45, %p46
      %p48 = scmp.ne.s32.totalorder %s40, %s43
      %p49 = scmp.eq.s32.totalorder %s10, 0
      %p50 = por %p48, %p49
      %p51 = scmp.ne.s32.totalorder %s40, %s43
      %p52 = scmp.eq.s32.totalorder %s15, 7
      %p53 = por %p51, %p52
      %p54 = scmp.ne.s32.totalorder %s43, %s44
      %p55 = scmp.eq.s32.totalorder %s15, 0
      %p56 = por %p54, %p55
      %p57 = scmp.ne.s32.totalorder %s43, %s44
      %p58 = scmp.eq.s32.totalorder %s16, 7
      %p59 = por %p57, %p58
      %p61 = scmp.ne.s32.totalorder %s44, %s60
      %p62 = scmp.eq.s32.totalorder %s16, 0
      %p63 = por %p61, %p62
      %s65 = sadd.s32 %s64, 1
      %p68 = scmp.eq.s32.totalorder %s10, 7
      %p69 = scmp.ne.s32.totalorder %s64, %s66
      %p70 = scmp.eq.s32.totalorder %s10, 0
      %p71 = por %p69, %p70
      %p72 = scmp.ne.s32.totalorder %s64, %s66
      %p73 = scmp.eq.s32.totalorder %s15, 7
      %p74 = por %p72, %p73
      %p75 = scmp.ne.s32.totalorder %s66, %s67
      %p76 = scmp.eq.s32.totalorder %s15, 0
      %p77 = por %p75, %p76
      %p78 = scmp.ne.s32.totalorder %s66, %s67
      %p79 = scmp.eq.s32.totalorder %s16, 7
      %p80 = por %p78, %p79
      %p82 = scmp.ne.s32.totalorder %s67, %s81
      %p83 = scmp.eq.s32.totalorder %s16, 0
      %p84 = por %p82, %p83
      %s86 = sadd.s32 %s85, 1
      %p89 = scmp.eq.s32.totalorder %s10, 7
      %p90 = scmp.ne.s32.totalorder %s85, %s87
      %p91 = scmp.eq.s32.totalorder %s10, 0
      %p92 = por %p90, %p91
      %p93 = scmp.ne.s32.totalorder %s85, %s87
      %p94 = scmp.eq.s32.totalorder %s15, 7
      %p95 = por %p93, %p94
      %p96 = scmp.ne.s32.totalorder %s87, %s88
      %p97 = scmp.eq.s32.totalorder %s15, 0
      %p98 = por %p96, %p97
      %p99 = scmp.ne.s32.totalorder %s87, %s88
      %p100 = scmp.eq.s32.totalorder %s16, 7
      %p101 = por %p99, %p100
      %p103 = scmp.ne.s32.totalorder %s88, %s102
      %p104 = scmp.eq.s32.totalorder %s16, 0
      %p105 = por %p103, %p104
      %s107 = sadd.s32 %s106, 1
      %p110 = scmp.eq.s32.totalorder %s10, 7
      %p111 = scmp.ne.s32.totalorder %s106, %s108
      %p112 = scmp.eq.s32.totalorder %s10, 0
      %p113 = por %p111, %p112
      %p114 = scmp.ne.s32.totalorder %s106, %s108
      %p115 = scmp.eq.s32.totalorder %s15, 7
      %p116 = por %p114, %p115
      %p117 = scmp.ne.s32.totalorder %s108, %s109
      %p118 = scmp.eq.s32.totalorder %s15, 0
      %p119 = por %p117, %p118
      %p120 = scmp.ne.s32.totalorder %s108, %s109
      %p121 = scmp.eq.s32.totalorder %s16, 7
      %p122 = por %p120, %p121
      %p124 = scmp.ne.s32.totalorder %s109, %s123
      %p125 = scmp.eq.s32.totalorder %s16, 0
      %p126 = por %p124, %p125
      %s127 = smul.u32 %s18, %s17
      %s128 = smul.u32 %s25, %s29
      %s129 = ssub.s32 %s127, %s128
      %p130 = scmp.eq.s32.totalorder %s129, 0
      %s132 = sadd.s32 %s131, 1
      %s133 = scalar_select %p130, %s131, %s132
      %p136 = pneg %p130
      %p137 = scmp.eq.s32.totalorder %s10, 7
      %p138 = por %p136, %p137
      %p139 = scmp.ne.s32.totalorder %s131, %s134
      %p140 = scmp.eq.s32.totalorder %s10, 0
      %p141 = por %p139, %p140
      %p142 = scmp.ne.s32.totalorder %s131, %s134
      %p143 = scmp.eq.s32.totalorder %s15, 7
      %p144 = por %p142, %p143
      %p145 = scmp.ne.s32.totalorder %s134, %s135
      %p146 = scmp.eq.s32.totalorder %s15, 0
      %p147 = por %p145, %p146
      %p148 = scmp.ne.s32.totalorder %s134, %s135
      %p149 = scmp.eq.s32.totalorder %s16, 7
      %p150 = por %p148, %p149
      %p152 = scmp.ne.s32.totalorder %s135, %s151
      %p153 = scmp.eq.s32.totalorder %s16, 0
      %p154 = por %p152, %p153
      %p155 = scmp.le.s32.totalorder 1, %s10
      %p156 = scmp.lt.s32.totalorder %s10, 9
      %p157 = pnand %p155, %p156
      %p158 = pneg %p157
      // Predicated region
      $region9: #{_lambda_.1} parent=5 // pred_check
        _
      $region10: #{_lambda_.1} parent=5 // pred_check_branch
        %160 = sbr.rel (%p157) target = $region12
      $region11: #{_lambda_.1} parent=5 // pred_region
        %s161 = ssub.s32 %s10, 1
        // Predicated region
        $region13: #{_lambda_.1} parent=11 // pred_check
          %p162 = pneg %p77
        $region14: #{_lambda_.1} parent=11 // pred_check_branch
          %164 = sbr.rel (%p162) target = $region16
        $region15: #{_lambda_.1} parent=11 // pred_region
          _
        $region16: #{_lambda_.1} parent=11 // pred_fallthru
          _
        // Predicated region
        $region17: #{_lambda_.1} parent=11 // pred_check
          %p165 = pneg %p98
        $region18: #{_lambda_.1} parent=11 // pred_check_branch
          %167 = sbr.rel (%p165) target = $region20
        $region19: #{_lambda_.1} parent=11 // pred_region
          _
        $region20: #{_lambda_.1} parent=11 // pred_fallthru
          _
        // Predicated region
        $region21: #{_lambda_.1} parent=11 // pred_check
          %p168 = pneg %p119
        $region22: #{_lambda_.1} parent=11 // pred_check_branch
          %170 = sbr.rel (%p168) target = $region24
        $region23: #{_lambda_.1} parent=11 // pred_region
          _
        $region24: #{_lambda_.1} parent=11 // pred_fallthru
          _
      $region12: #{_lambda_.1} parent=5 // pred_fallthru
        _
      %p171 = scmp.lt.s32.totalorder %s10, 8
      // Predicated region
      $region25: #{_lambda_.1} parent=5 // pred_check
        %p172 = pneg %p171
      $region26: #{_lambda_.1} parent=5 // pred_check_branch
        %174 = sbr.rel (%p172) target = $region28
      $region27: #{_lambda_.1} parent=5 // pred_region
        // Predicated region
        $region29: #{_lambda_.1} parent=27 // pred_check
          %p175 = pneg %p50
        $region30: #{_lambda_.1} parent=27 // pred_check_branch
          %177 = sbr.rel (%p175) target = $region32
        $region31: #{_lambda_.1} parent=27 // pred_region
          %s178 = sand.u32 %s40, 1
          %s179 = sand.u32 %s40, 1
          %s180 = smul.addr %s179, 32
          %s181 = scalar_lea.vmem [#allocation7], %s180
          %s182 = ssub.s32 1, %s17
          %s183 = smul.u32 %s18, %s182
          %s184 = smul.u32 %s17, 3
          %s185 = sadd.s32 %s183, %s184
          %s186 = smul.addr %s185, 4
          %s187 = scalar_lea.vmem %s0, %s186
          // Predicated region
          $region33: #{_lambda_.1} parent=31 // pred_check
            _
          $region34: #{_lambda_.1} parent=31 // pred_check_branch
            %189 = sbr.rel (0) target = $region36
          $region35: #{_lambda_.1} parent=31 // pred_region
            // Predicated region
            $region37: #{_lambda_.1} parent=35 // pred_check
              _
            $region38: #{_lambda_.1} parent=35 // pred_check_branch
              %191 = sbr.rel target = $region40
            $region39: #{_lambda_.1} parent=35 // pred_region
              // Predicated region
              $region52: #{_lambda_.1} parent=39 // pred_check
                _
              $region53: #{_lambda_.1} parent=39 // pred_check_branch
                %221 = sbr.rel (0) target = $region55
              $region54: #{_lambda_.1} parent=39 // pred_region
                loop: start=0, step=1, limit=1
                $region56: #{_lambda_.1} parent=54 // loop_pre_header
                  _
                $region57: #{_lambda_.1} parent=54 // loop_header
                  %s223 = sphi 0, %s227
                  %p224 = scmp.ge.s32.totalorder %s223, 1
                  %s228 = sphi %s187, %s187
                  %s229 = sphi %s181, %s181
                $region58: #{_lambda_.1} parent=54 // loop_header_branch
                  %226 = sbr.rel (%p224) target = $region62
                $region59: #{_lambda_.1} parent=54 // loop_body
                  _
                $region60: #{_lambda_.1} parent=54 // loop_footer
                  %s227 = sadd.s32 1, %s223
                $region61: #{_lambda_.1} parent=54 // loop_footer_branch
                  %222 = sbr.rel target = $region57
                $region62: #{_lambda_.1} parent=54 // loop_exit
                  _
                %s231 = ssub.s32 16, 1
                loop: start=0, step=1, limit=1
                $region63: #{_lambda_.1} parent=54 // loop_pre_header
                  _
                $region64: #{_lambda_.1} parent=54 // loop_header
                  %s233 = sphi 0, %s237
                  %p234 = scmp.ge.s32.totalorder %s233, 1
                  %s238 = sphi %s187, %s187
                  %s239 = sphi %s181, %s181
                $region65: #{_lambda_.1} parent=54 // loop_header_branch
                  %236 = sbr.rel (%p234) target = $region69
                $region66: #{_lambda_.1} parent=54 // loop_body
                  %v240 = vld [vmem:[%s238] sm:%s231]
                  %241 = vst [vmem:[%s239] sm:%s231] %v240
                  %v242 = vld [vmem:[%s238 + $0x10] sm:%s231]
                  %243 = vst [vmem:[%s239 + $0x4] sm:%s231] %v242
                  %v244 = vld [vmem:[%s238 + $0x20] sm:%s231]
                  %245 = vst [vmem:[%s239 + $0x8] sm:%s231] %v244
                  %v246 = vld [vmem:[%s238 + $0x30] sm:%s231]
                  %247 = vst [vmem:[%s239 + $0xc] sm:%s231] %v246
                  %v248 = vld [vmem:[%s238 + $0x40] sm:%s231]
                  %249 = vst [vmem:[%s239 + $0x10] sm:%s231] %v248
                  %v250 = vld [vmem:[%s238 + $0x50] sm:%s231]
                  %251 = vst [vmem:[%s239 + $0x14] sm:%s231] %v250
                  %v252 = vld [vmem:[%s238 + $0x60] sm:%s231]
                  %253 = vst [vmem:[%s239 + $0x18] sm:%s231] %v252
                  %v254 = vld [vmem:[%s238 + $0x70] sm:%s231]
                  %255 = vst [vmem:[%s239 + $0x1c] sm:%s231] %v254
                $region67: #{_lambda_.1} parent=54 // loop_footer
                  %s237 = sadd.s32 1, %s233
                $region68: #{_lambda_.1} parent=54 // loop_footer_branch
                  %232 = sbr.rel target = $region64
                $region69: #{_lambda_.1} parent=54 // loop_exit
                  _
              $region55: #{_lambda_.1} parent=39 // pred_fallthru
                _
            $region40: #{_lambda_.1} parent=35 // pred_fallthru
              _
            // Predicated region
            $region41: #{_lambda_.1} parent=35 // pred_check
              _
            $region42: #{_lambda_.1} parent=35 // pred_check_branch
              %193 = sbr.rel (0) target = $region44
            $region43: #{_lambda_.1} parent=35 // pred_region
              %s195 = ssub.s32 16, 1
              loop: start=0, step=1, limit=1
              $region45: #{_lambda_.1} parent=43 // loop_pre_header
                _
              $region46: #{_lambda_.1} parent=43 // loop_header
                %s197 = sphi 0, %s201
                %p198 = scmp.ge.s32.totalorder %s197, 1
                %s202 = sphi %s187, %s187
                %s203 = sphi %s181, %s181
              $region47: #{_lambda_.1} parent=43 // loop_header_branch
                %200 = sbr.rel (%p198) target = $region51
              $region48: #{_lambda_.1} parent=43 // loop_body
                %v204 = vld [vmem:[%s202] sm:%s195]
                %205 = vst [vmem:[%s203] sm:%s195] %v204
                %v206 = vld [vmem:[%s202 + $0x10] sm:%s195]
                %207 = vst [vmem:[%s203 + $0x4] sm:%s195] %v206
                %v208 = vld [vmem:[%s202 + $0x20] sm:%s195]
                %209 = vst [vmem:[%s203 + $0x8] sm:%s195] %v208
                %v210 = vld [vmem:[%s202 + $0x30] sm:%s195]
                %211 = vst [vmem:[%s203 + $0xc] sm:%s195] %v210
                %v212 = vld [vmem:[%s202 + $0x40] sm:%s195]
                %213 = vst [vmem:[%s203 + $0x10] sm:%s195] %v212
                %v214 = vld [vmem:[%s202 + $0x50] sm:%s195]
                %215 = vst [vmem:[%s203 + $0x14] sm:%s195] %v214
                %v216 = vld [vmem:[%s202 + $0x60] sm:%s195]
                %217 = vst [vmem:[%s203 + $0x18] sm:%s195] %v216
                %v218 = vld [vmem:[%s202 + $0x70] sm:%s195]
                %219 = vst [vmem:[%s203 + $0x1c] sm:%s195] %v218
              $region49: #{_lambda_.1} parent=43 // loop_footer
                %s201 = sadd.s32 1, %s197
              $region50: #{_lambda_.1} parent=43 // loop_footer_branch
                %196 = sbr.rel target = $region46
              $region51: #{_lambda_.1} parent=43 // loop_exit
                _
            $region44: #{_lambda_.1} parent=35 // pred_fallthru
              _
          $region36: #{_lambda_.1} parent=31 // pred_fallthru
            _
          %256 = vnop
        $region32: #{_lambda_.1} parent=27 // pred_fallthru
          _
      $region28: #{_lambda_.1} parent=5 // pred_fallthru
        _
      %p257 = scmp.le.s32.totalorder 1, %s10
      %p258 = scmp.lt.s32.totalorder %s10, 9
      %p259 = pnand %p257, %p258
      %p260 = pneg %p259
      // Predicated region
      $region70: #{_lambda_.1} parent=5 // pred_check
        _
      $region71: #{_lambda_.1} parent=5 // pred_check_branch
        %262 = sbr.rel (%p259) target = $region73
      $region72: #{_lambda_.1} parent=5 // pred_region
        %s263 = ssub.s32 %s10, 1
        %s264 = sand.u32 %s43, 1
        %s265 = sand.u32 %s43, 1
        %s266 = smul.addr %s265, 32
        %s267 = scalar_lea.vmem [#allocation7], %s266
        // Predicated region
        $region74: #{_lambda_.1} parent=72 // pred_check
          %p268 = pneg %p56
        $region75: #{_lambda_.1} parent=72 // pred_check_branch
          %270 = sbr.rel (%p268) target = $region77
        $region76: #{_lambda_.1} parent=72 // pred_region
          _
        $region77: #{_lambda_.1} parent=72 // pred_fallthru
          _
        %s271 = sand.u32 %s43, 1
        %s272 = sand.u32 %s43, 1
        %s273 = smul.addr %s272, 32
        %s274 = scalar_lea.vmem [#allocation7], %s273
        %p275 = pneg %p56
        %p276 = pneg %p53
        %p277 = pneg %p77
        %p278 = pneg %p74
        %p279 = pneg %p98
        %p280 = pneg %p95
        %p281 = pneg %p119
        %p282 = pneg %p116
        %p283 = pneg %p147
        %p284 = pneg %p144
        %s285 = smul.u32 %s20, %s19
        %p286 = scmp.lt.s32.totalorder %s285, 3
        %s287 = scalar_select %p286, %s285, 3
        %s288 = smul.addr %s287, 8
        %s289 = scalar_lea.vmem %s4, %s288
        %s290 = ssub.s32 1, %s19
        %s291 = smul.u32 %s20, %s290
        %s292 = smul.u32 %s19, 3
        %s293 = sadd.s32 %s291, %s292
        %s294 = smul.u32 %s20, %s19
        %p295 = scmp.lt.s32.totalorder %s294, 3
        %s296 = scalar_select %p295, %s294, 3
        %s297 = smul.addr %s296, 8
        %s298 = scalar_lea.vmem %s4, %s297
        %s299 = smul.u32 %s20, %s19
        %s301 = smul.u32 %s20, 128
        %p302 = scmp.eq.s32.totalorder %s19, 0
        %p303 = scmp.eq.s32.totalorder %s20, 0
        %p304 = pnand %p302, %p303
        %p305 = pneg %p304
        // Predicated region
        $region78: #{_lambda_.1} parent=72 // pred_check
          _
        $region79: #{_lambda_.1} parent=72 // pred_check_branch
          %307 = sbr.rel (%p304) target = $region81
        $region80: #{_lambda_.1} parent=72 // pred_region
          %vm308 = vcmask 7168
          %309 = vst.msk [vmem:[#allocation3] sm:$0xff] %vm308, 0.0
          %310 = vst.msk [vmem:[#allocation4] sm:$0xff] %vm308, 0.0
        $region81: #{_lambda_.1} parent=72 // pred_fallthru
          _
        // Predicated region
        $region82: #{_lambda_.1} parent=72 // pred_check
          %p311 = pneg %p302
        $region83: #{_lambda_.1} parent=72 // pred_check_branch
          %313 = sbr.rel (%p311) target = $region85
        $region84: #{_lambda_.1} parent=72 // pred_region
          %v314 = vld [vmem:[%s1] sm:$0xf]
          %v315 = vld [vmem:[%s267] sm:$0xf]
          %v316 = vld [vmem:[%s267 + $0x4] sm:$0xf]
          %v317 = vld [vmem:[%s267 + $0x8] sm:$0xf]
          %v318 = vld [vmem:[%s267 + $0xc] sm:$0xf]
          %v319 = vld [vmem:[%s267 + $0x10] sm:$0xf]
          %v320 = vld [vmem:[%s267 + $0x14] sm:$0xf]
          %v321 = vld [vmem:[%s267 + $0x18] sm:$0xf]
          %v322 = vld [vmem:[%s267 + $0x1c] sm:$0xf]
          %v331 = vunpack.c.l.b16 %v315
          %v332 = vunpack.c.l.b16 %v316
          %v333 = vunpack.c.l.b16 %v317
          %v334 = vunpack.c.l.b16 %v318
          %v335 = vunpack.c.l.b16 %v319
          %v336 = vunpack.c.l.b16 %v320
          %v337 = vunpack.c.l.b16 %v321
          %v338 = vunpack.c.l.b16 %v322
          %v339 = vpack.c.b16 %v332, %v331
          %v340 = vpack.c.b16 %v334, %v333
          %v341 = vpack.c.b16 %v336, %v335
          %v342 = vpack.c.b16 %v338, %v337
          %vm347 = vcmask 523264
          %v349 = vsel %vm347, %v314, 0
          %351 = vmatpush.bf16.msra.mxu0 0
          %352 = vmatpush.bf16.msra.mxu0 0
          %353 = vmatpush.bf16.msra.mxu0 0
          %354 = vmatpush.bf16.msra.mxu0 0
          %355 = vmatpush.bf16.msra.mxu0 %v342
          %356 = vmatpush.bf16.msra.mxu0 %v341
          %357 = vmatpush.bf16.msra.mxu0 %v340
          %358 = vmatpush.bf16.msra.mxu0 %v339
          %359 = vmatmul.bf16.gmra.mxu0 %v349
          %v360 = vpop.f32.mrf.mxu0
          %v361 = vadd.f32 0.0, %v360
          %v362 = vpop.f32.mrf.mxu0
          %363 = vdwg.mxu0
          %s364 = sshra.s32 %s301, 7
          %s365 = sand.u32 %s301, 127
          %s366 = smul.addr %s364, 8
          %s367 = scalar_lea.vmem [#allocation2], %s366
          %368 = vst [vmem:[%s367] sm:$0xff] %v361
          %v369 = vld [vmem:[#allocation3] sm:$0xff]
          %370 = vadd.xlane.f32.xlu0 %v361
          %v371 = vpop.xlane.xlu0 %370
          %v372 = vadd.f32 %v369, %v371
          %vm373 = vcmask 7168
          %374 = vst.msk [vmem:[#allocation3] sm:$0xff] %vm373, %v372
          %v375 = vld [vmem:[#allocation4] sm:$0xff]
          %v376 = vmul.f32 %v361, %v361
          %377 = vadd.xlane.f32.xlu0 %v376
          %v378 = vpop.xlane.xlu0 %377
          %v379 = vadd.f32 %v375, %v378
          %380 = vst.msk [vmem:[#allocation4] sm:$0xff] %vm373, %v379
        $region85: #{_lambda_.1} parent=72 // pred_fallthru
          _
        %p381 = scmp.eq.s32.totalorder %s19, 1
        %p382 = pnand %p381, %p303
        %p383 = pneg %p382
        // Predicated region
        $region86: #{_lambda_.1} parent=72 // pred_check
          _
        $region87: #{_lambda_.1} parent=72 // pred_check_branch
          %385 = sbr.rel (%p382) target = $region89
        $region88: #{_lambda_.1} parent=72 // pred_region
          %v386 = vld [vmem:[#allocation3] sm:$0xff]
          %v387 = vmul.f32 %v386, 0.001953125
          %v388 = vld [vmem:[#allocation4] sm:$0xff]
          %v389 = vmul.f32 %v388, 0.001953125
          %v390 = vmul.f32 %v387, %v387
          %v391 = vsub.f32 %v389, %v390
          %v392 = vmax.f32 %v391, 0.0
          %v393 = vld [vmem:[%s2] sm:$0xff]
          %v394 = vadd.f32 %v392, 1e-05
          %v395 = vrsqrt.pop %v394
          %v396 = vmul.f32 %v395, %v394
          %v397 = vmul.f32 %v396, %v395
          %v398 = vmul.f32 0.5, %v397
          %v399 = vsub.f32 1.5, %v398
          %v400 = vmul.f32 %v395, %v399
          %vm401 = vweird.f32 %v394
          %vm402 = vweird.f32 %v395
          %vm403 = vmor %vm401, %vm402
          %v404 = vsel %vm403, %v395, %v400
          %v405 = vmul.f32 %v393, %v404
          %vm406 = vcmask 7168
          %407 = vst.msk [vmem:[#allocation5] sm:$0xff] %vm406, %v405
          %v408 = vld [vmem:[%s3] sm:$0xff]
          %v409 = vld [vmem:[#allocation5] sm:$0xff]
          %v410 = vmul.f32 %v387, %v409
          %v411 = vsub.f32 %v408, %v410
          %412 = vst.msk [vmem:[#allocation6] sm:$0xff] %vm406, %v411
        $region89: #{_lambda_.1} parent=72 // pred_fallthru
          _
        // Predicated region
        $region90: #{_lambda_.1} parent=72 // pred_check
          %p413 = pneg %p381
        $region91: #{_lambda_.1} parent=72 // pred_check_branch
          %415 = sbr.rel (%p413) target = $region93
        $region92: #{_lambda_.1} parent=72 // pred_region
          %s416 = sshra.s32 %s301, 7
          %s417 = sand.u32 %s301, 127
          %s418 = smul.addr %s416, 8
          %s419 = scalar_lea.vmem [#allocation2], %s418
          %v420 = vld [vmem:[%s419] sm:$0xff]
          %v421 = vld [vmem:[#allocation5] sm:$0xff]
          %423 = vset.pattern.permute.xlu0 0
          %424 = vperm.xlu0 %423, %v421
          %v425 = vpop.permute.xlu0 %424
          %v427 = vmul.f32 %v420, %v425
          %v428 = vld [vmem:[#allocation6] sm:$0xff]
          %430 = vset.pattern.permute.xlu0 0
          %431 = vperm.xlu0 %430, %v428
          %v432 = vpop.permute.xlu0 %431
          %v434 = vadd.f32 %v427, %v432
          %vm435 = vcmp.ge.f32.partialorder %v434, 0.0
          %v436 = vmul.f32 %v434, 0.2
          %v437 = vsel %vm435, %v434, %v436
          %438 = vst [vmem:[%s298] sm:$0xff] %v437
        $region93: #{_lambda_.1} parent=72 // pred_fallthru
          _
        %s439 = smul.u32 %s20, %s19
        %p440 = scmp.lt.s32.totalorder %s439, 3
        %s441 = scalar_select %p440, %s439, 3
        %s442 = smul.addr %s441, 8
        %s443 = scalar_lea.vmem %s4, %s442
        // Predicated region
        $region94: #{_lambda_.1} parent=72 // pred_check
          %p444 = pneg %p144
        $region95: #{_lambda_.1} parent=72 // pred_check_branch
          %446 = sbr.rel (%p444) target = $region97
        $region96: #{_lambda_.1} parent=72 // pred_region
          %s447 = smul.u32 %s20, %s19
        $region97: #{_lambda_.1} parent=72 // pred_fallthru
          _
      $region73: #{_lambda_.1} parent=5 // pred_fallthru
        _
      %p448 = scmp.le.s32.totalorder 2, %s10
      // Predicated region
      $region98: #{_lambda_.1} parent=5 // pred_check
        %p449 = pneg %p448
      $region99: #{_lambda_.1} parent=5 // pred_check_branch
        %451 = sbr.rel (%p449) target = $region101
      $region100: #{_lambda_.1} parent=5 // pred_region
        %s452 = ssub.s32 %s10, 2
        // Predicated region
        $region102: #{_lambda_.1} parent=100 // pred_check
          %p453 = pneg %p150
        $region103: #{_lambda_.1} parent=100 // pred_check_branch
          %455 = sbr.rel (%p453) target = $region105
        $region104: #{_lambda_.1} parent=100 // pred_region
          %s456 = smul.u32 %s22, %s21
          %p457 = scmp.lt.s32.totalorder %s456, 3
          %s458 = scalar_select %p457, %s456, 3
          %s459 = smul.addr %s458, 8
          %s460 = scalar_lea.vmem %s4, %s459
        $region105: #{_lambda_.1} parent=100 // pred_fallthru
          _
      $region101: #{_lambda_.1} parent=5 // pred_fallthru
        _
    $region6: #{_lambda_.1} parent=1 // loop_footer
      %s14 = sadd.s32 1, %s10
    $region7: #{_lambda_.1} parent=1 // loop_footer_branch
      %9 = sbr.rel target = $region3
    $region8: #{_lambda_.1} parent=1 // loop_exit
      _

</llo_original>
